<compile_context>
chip_gen: v5e
topology: v5e:2x2
jax: 0.10.0
libtpu: 0.0.40
codegen_flags: <defaults>
</compile_context>

<pallas_src>
import math
import functools

import jax
import jax.numpy as jnp
from jax.experimental import pallas as pl
from jax.experimental.pallas import tpu as pltpu

_MASK_VALUE = -1e30  # finite stand-in for -inf (NaN-free flash recurrence)


# ------------------------------------ small helpers ------------------------------------

def _round_up(x, m):
    return ((x + m - 1) // m) * m


def _tile(dim, target, align):
    """Largest `align`-multiple divisor of `dim` that is <= target, else `dim`."""
    if dim <= target:
        return dim
    t = (target // align) * align
    while t >= align:
        if dim % t == 0:
            return t
        t -= align
    return dim


def _vmem_capacity_bytes():
    """Physical VMEM of the local chip (v5e/v6e 128 MiB, v7x 64 MiB)."""
    try:
        info = pltpu.get_tpu_info()
        cap = getattr(info, "vmem_capacity_bytes", None)
        if cap:
            return int(cap)
    except Exception:
        pass
    return 64 * 1024 * 1024  # conservative default (v7x per-core)


# ----------------------------- Tiled linear (x @ W + b) kernel -------------------------

def _linear_kernel(x_ref, w_ref, b_ref, o_ref, acc_ref):
    @pl.when(pl.program_id(2) == 0)
    def _():
        acc_ref[...] = jnp.zeros(acc_ref.shape, jnp.float32)

    # bf16 MXU operands, f32 accumulation.
    acc_ref[...] += jnp.dot(x_ref[...].astype(jnp.bfloat16),
                            w_ref[...].astype(jnp.bfloat16),
                            preferred_element_type=jnp.float32)

    @pl.when(pl.program_id(2) == pl.num_programs(2) - 1)
    def _():
        o_ref[...] = (acc_ref[...] + b_ref[...]).astype(o_ref.dtype)


def pallas_linear(x2d, w_t, b, *, tm_target=512, tn_target=512, tk_target=512):
    """x2d: (M, K), w_t: (K, N) (already transposed), b: (N,) -> (M, N)."""
    M, K = x2d.shape
    K2, N = w_t.shape
    assert K == K2
    tm = _tile(M, tm_target, 8)
    tn = _tile(N, tn_target, 128)
    tk = _tile(K, tk_target, 128)
    grid = (M // tm, N // tn, K // tk)
    vmem_cap = _vmem_capacity_bytes()
    return pl.pallas_call(
        _linear_kernel,
        out_shape=jax.ShapeDtypeStruct((M, N), x2d.dtype),
        grid=grid,
        in_specs=[
            pl.BlockSpec((tm, tk), lambda i, j, kk: (i, kk)),
            pl.BlockSpec((tk, tn), lambda i, j, kk: (kk, j)),
            pl.BlockSpec((1, tn), lambda i, j, kk: (0, j)),
        ],
        out_specs=pl.BlockSpec((tm, tn), lambda i, j, kk: (i, j)),
        scratch_shapes=[pltpu.VMEM((tm, tn), jnp.float32)],
        compiler_params=pltpu.CompilerParams(
            dimension_semantics=("parallel", "parallel", "arbitrary"),
            vmem_limit_bytes=int(vmem_cap * 3 // 4),
        ),
        cost_estimate=pl.CostEstimate(
            flops=int(2 * M * N * K),
            transcendentals=0,
            bytes_accessed=int(4 * (M * K + K * N + M * N)),
        ),
    )(x2d, w_t, b.reshape(1, N))


# ----------------------------- Flash RoPE attention kernel -----------------------------

def _rope_rotate(x, cos, sin):
    """Split-half RoPE: x * [c|c] + roll(x, D/2) * [-s|s].

    x: (hg, T, D) f32; cos/sin: (T, D) full-width tables (sin carries the sign).
    pltpu.roll (XLU slot, nearly free) when the lane dim is register-aligned,
    slice+concat fallback otherwise (e.g. tiny test head dims).
    """
    d = x.shape[-1]
    d2 = d // 2
    if d % 128 == 0:
        rolled = pltpu.roll(x, d2, axis=-1)
    else:
        rolled = jnp.concatenate([x[..., d2:], x[..., :d2]], axis=-1)
    return x * cos[None] + rolled * sin[None]


def _flash_rope_attn_kernel(*refs, has_attn, has_kpm):
    q_ref, k_ref, v_ref, cq_ref, sq_ref, ck_ref, sk_ref = refs[:7]
    idx = 7
    am_ref = kpm_ref = None
    if has_attn:
        am_ref = refs[idx]; idx += 1
    if has_kpm:
        kpm_ref = refs[idx]; idx += 1
    o_ref = refs[idx]
    qr_sc, m_sc, l_sc, acc_sc = refs[idx + 1: idx + 5]

    ki = pl.program_id(3)

    @pl.when(ki == 0)
    def _():
        # Rotate (RoPE) the query tile once per (b, head-group, q-tile); the
        # 1/sqrt(D) scale is already folded into Wq.  Cache bf16 for the MXU.
        q = q_ref[0].astype(jnp.float32)                  # (hg, Tq, D)
        qr_sc[...] = _rope_rotate(q, cq_ref[...], sq_ref[...]).astype(qr_sc.dtype)
        m_sc[...] = jnp.full(m_sc.shape, -jnp.inf, jnp.float32)
        l_sc[...] = jnp.zeros(l_sc.shape, jnp.float32)
        acc_sc[...] = jnp.zeros(acc_sc.shape, jnp.float32)

    k = k_ref[0].astype(jnp.float32)                      # (hg, Tkv, D)
    kr = _rope_rotate(k, ck_ref[...], sk_ref[...]).astype(jnp.bfloat16)
    v = v_ref[0].astype(jnp.bfloat16)

    # All heads of the group at once; bf16 MXU operands, f32 accumulation.
    s = jnp.einsum("hqd,hkd->hqk", qr_sc[...], kr,
                   preferred_element_type=jnp.float32)    # (hg, Tq, Tkv)
    if has_attn:
        s = s + am_ref[...][None, :, :]                   # (1, Tq, Tkv) bias
    if has_kpm:
        s = s + kpm_ref[...]                              # (1, 1, Tkv) bias

    m_prev = m_sc[...]
    m_new = jnp.maximum(m_prev, jnp.max(s, axis=-1, keepdims=True))
    alpha = jnp.exp(m_prev - m_new)
    p = jnp.exp(s - m_new)
    l_sc[...] = alpha * l_sc[...] + jnp.sum(p, axis=-1, keepdims=True)
    acc_sc[...] = alpha * acc_sc[...] + jnp.einsum(
        "hqk,hkd->hqd", p.astype(jnp.bfloat16), v,
        preferred_element_type=jnp.float32)
    m_sc[...] = m_new

    @pl.when(ki == pl.num_programs(3) - 1)
    def _():
        # dropout(p) is identity in eval mode.  Exact division: once per q tile.
        o = acc_sc[...] / l_sc[...]                       # (hg, Tq, D) f32
        hg = o.shape[0]
        # Lane-dense (Tq, hg*D) output block -> contiguous HBM writeback, no
        # wrapper-side transpose of the attention output.
        o_ref[0] = jnp.concatenate([o[h] for h in range(hg)],
                                   axis=-1).astype(o_ref.dtype)


def _attn_layout(L, *, q_tile_target=256, kv_tile_target=256):
    """Padded length + tile sizes.  Tiles are always full-L or 128-aligned."""
    if L <= max(q_tile_target, kv_tile_target):
        L_pad = _round_up(L, 8)
        return L_pad, L_pad, L_pad
    L_pad = _round_up(L, 128)
    tq = _tile(L_pad, q_tile_target, 128)
    tkv = _tile(L_pad, kv_tile_target, 128)
    return L_pad, tq, tkv


def _pick_head_group(H, D, tq, tkv, vmem_budget):
    """Heads per grid step: biggest divisor of H whose working set fits VMEM.

    The output block's lane width is hg*D, so hg must keep it 128-aligned
    (or cover all heads, i.e. the full E axis).
    """
    def bytes_needed(hg):
        blocks = 4 * (hg * tq * D + 2 * hg * tkv * D) * 2     # q,k,v double-buffered
        out = 4 * tq * hg * D * 2
        tables = 4 * 2 * (tq * D + tkv * D) * 2
        scratch = 2 * hg * tq * D + 4 * hg * tq * D + 8 * hg * tq
        masks = 4 * (tq * tkv + tkv) * 2
        return blocks + out + tables + scratch + masks

    cands = [d for d in range(H, 0, -1)
             if H % d == 0 and (d == H or (d * D) % 128 == 0)]
    for hg in cands:
        if bytes_needed(hg) <= vmem_budget:
            return hg
    return cands[-1]


def flash_rope_attention(q, k, v, cos_w, sin_w, *, attn_bias=None, kpm_bias=None,
                         tq, tkv):
    """q, k, v: (B, H, Lp, D); q/k in split-half RoPE column order, q pre-scaled.
    cos_w, sin_w: (Lp, D) full-width tables (sin carries the [-s|s] sign).
    attn_bias: optional (Lp, Lp) f32; kpm_bias: optional (B, 1, Lp) f32.
    Returns (B, Lp, H*D)."""
    B, H, Lp, D = q.shape
    E = H * D
    nq, nkv = Lp // tq, Lp // tkv

    vmem_cap = _vmem_capacity_bytes()
    hg = _pick_head_group(H, D, tq, tkv, vmem_budget=int(vmem_cap * 0.6))
    nhg = H // hg

    has_attn = attn_bias is not None
    has_kpm = kpm_bias is not None

    in_specs = [
        pl.BlockSpec((1, hg, tq, D), lambda b, g, qi, ki: (b, g, qi, 0)),
        pl.BlockSpec((1, hg, tkv, D), lambda b, g, qi, ki: (b, g, ki, 0)),
        pl.BlockSpec((1, hg, tkv, D), lambda b, g, qi, ki: (b, g, ki, 0)),
        pl.BlockSpec((tq, D), lambda b, g, qi, ki: (qi, 0)),
        pl.BlockSpec((tq, D), lambda b, g, qi, ki: (qi, 0)),
        pl.BlockSpec((tkv, D), lambda b, g, qi, ki: (ki, 0)),
        pl.BlockSpec((tkv, D), lambda b, g, qi, ki: (ki, 0)),
    ]
    args = [q, k, v, cos_w, sin_w, cos_w, sin_w]
    if has_attn:
        in_specs.append(pl.BlockSpec((tq, tkv), lambda b, g, qi, ki: (qi, ki)))
        args.append(attn_bias)
    if has_kpm:
        in_specs.append(pl.BlockSpec((1, 1, tkv), lambda b, g, qi, ki: (b, 0, ki)))
        args.append(kpm_bias)

    kernel = functools.partial(_flash_rope_attn_kernel,
                               has_attn=has_attn, has_kpm=has_kpm)

    flops = int(4 * B * H * Lp * Lp * D)                 # scores + PV
    transc = int(B * H * Lp * Lp)                        # exp()
    bytes_acc = int(4 * (B * H * Lp * D * (1 + 2 * nq) + B * Lp * E)
                    + (4 * Lp * Lp if has_attn else 0)
                    + (4 * B * Lp if has_kpm else 0))

    return pl.pallas_call(
        kernel,
        out_shape=jax.ShapeDtypeStruct((B, Lp, E), q.dtype),
        grid=(B, nhg, nq, nkv),
        in_specs=in_specs,
        out_specs=pl.BlockSpec((1, tq, hg * D), lambda b, g, qi, ki: (b, qi, g)),
        scratch_shapes=[
            pltpu.VMEM((hg, tq, D), jnp.bfloat16),       # rotated, pre-scaled q
            pltpu.VMEM((hg, tq, 1), jnp.float32),        # running max
            pltpu.VMEM((hg, tq, 1), jnp.float32),        # running sum
            pltpu.VMEM((hg, tq, D), jnp.float32),        # output accumulator
        ],
        compiler_params=pltpu.CompilerParams(
            dimension_semantics=("parallel", "parallel", "parallel", "arbitrary"),
            vmem_limit_bytes=int(vmem_cap * 3 // 4),
        ),
        cost_estimate=pl.CostEstimate(flops=flops, transcendentals=transc,
                                      bytes_accessed=bytes_acc),
    )(*args)


# ----------------------------------- Module wrapper ------------------------------------

class RoPEAttentionPallas:
    def __init__(self, embed_dim, num_heads, dropout=0.1, *, key):
        assert embed_dim % num_heads == 0
        self.embed_dim = embed_dim
        self.num_heads = num_heads
        self.head_dim = embed_dim // num_heads
        self.dropout = dropout  # eval-mode: unused

        E, H, D = embed_dim, num_heads, self.head_dim
        bound = 1.0 / math.sqrt(E)
        ks = jax.random.split(key, 8)

        def u(k, shape):
            return jax.random.uniform(k, shape, jnp.float32, -bound, bound)

        # Original (torch-style (out, in)) parameters, kept for the reference.
        self.Wq, self.bq = u(ks[0], (E, E)), u(ks[1], (E,))
        self.Wk, self.bk = u(ks[2], (E, E)), u(ks[3], (E,))
        self.Wv, self.bv = u(ks[4], (E, E)), u(ks[5], (E,))
        self.Wp, self.bp = u(ks[6], (E, E)), u(ks[7], (E,))

        # Fold (a) the interleaved->split-half RoPE permutation (score-preserving)
        # and (b) the 1/sqrt(D) score scale into the Q/K projection rows, and
        # fuse Q/K/V into one weight.
        perm_head = jnp.concatenate([jnp.arange(0, D, 2), jnp.arange(1, D, 2)])
        perm = (jnp.arange(H)[:, None] * D + perm_head[None, :]).reshape(E)
        scale = 1.0 / math.sqrt(D)
        Wq_p, bq_p = self.Wq[perm, :] * scale, self.bq[perm] * scale
        Wk_p, bk_p = self.Wk[perm, :], self.bk[perm]
        self.Wqkv_t = jnp.concatenate([Wq_p, Wk_p, self.Wv], axis=0).T   # (E, 3E)
        self.bqkv = jnp.concatenate([bq_p, bk_p, self.bv], axis=0)       # (3E,)
        self.Wp_t = self.Wp.T                                            # (E, E)

        self._rope_cache = {}  # L_pad -> (cos_wide, sin_signed)

    def _rope_tables(self, L):
        tbl = self._rope_cache.get(L)
        if tbl is None:
            D = self.head_dim
            inv_freq = 1.0 / (10000.0 ** (jnp.arange(0, D, 2, dtype=jnp.float32) / D))
            t = jnp.arange(L, dtype=jnp.float32)
            freqs = t[:, None] * inv_freq[None, :]            # (L, D//2)
            cos, sin = jnp.cos(freqs), jnp.sin(freqs)
            # Full-width, lane-dense tables for the roll-form rotation.
            tbl = (jnp.concatenate([cos, cos], axis=-1),      # (L, D)
                   jnp.concatenate([-sin, sin], axis=-1))     # (L, D), signed
            self._rope_cache[L] = tbl
        return tbl

    def __call__(self, x, attn_mask=None, key_padding_mask=None):
        B, L, E = x.shape
        H, D = self.num_heads, self.head_dim

        L_pad, tq, tkv = _attn_layout(L)
        if L_pad != L:
            x = jnp.pad(x, ((0, 0), (0, L_pad - L), (0, 0)))

        # Fused QKV projection (one tiled, pipelined bf16-MXU matmul).
        x2 = x.reshape(B * L_pad, E)
        qkv = pallas_linear(x2, self.Wqkv_t, self.bqkv)                  # (B*Lp, 3E)
        # Single input-side relayout to head-major.  k/v are re-streamed once per
        # q tile inside the flash loop, so one HBM transpose here is cheaper than
        # per-kv-step in-kernel transposes of a token-major layout.
        qkv = qkv.reshape(B, L_pad, 3, H, D).transpose(2, 0, 3, 1, 4)    # (3,B,H,Lp,D)
        q, k, v = qkv[0], qkv[1], qkv[2]

        cos_w, sin_w = self._rope_tables(L_pad)

        # Small additive biases only (never a (B, L, L) tensor).
        am_bias = None
        if attn_mask is not None:
            am = jnp.asarray(attn_mask).reshape(L, L)
            am_bias = jnp.where(am, _MASK_VALUE, 0.0).astype(jnp.float32)
            if L_pad != L:
                am_bias = jnp.pad(am_bias, ((0, L_pad - L), (0, L_pad - L)))
        kpm_bias = None
        if key_padding_mask is not None or L_pad != L:
            kb = jnp.zeros((B, L_pad), jnp.float32)
            if key_padding_mask is not None:
                kpm = jnp.asarray(key_padding_mask).reshape(B, L)
                kb = kb.at[:, :L].set(
                    jnp.where(kpm, _MASK_VALUE, 0.0).astype(jnp.float32))
            if L_pad != L:
                kb = kb.at[:, L:].set(_MASK_VALUE)
            kpm_bias = kb.reshape(B, 1, L_pad)

        out = flash_rope_attention(q, k, v, cos_w, sin_w,
                                   attn_bias=am_bias, kpm_bias=kpm_bias,
                                   tq=tq, tkv=tkv)                       # (B, Lp, E)

        out = pallas_linear(out.reshape(B * L_pad, E), self.Wp_t, self.bp)
        return out.reshape(B, L_pad, E)[:, :L]


# ---------------------------- Pure-JAX reference (for checking) ------------------------

def _reference(mod, x, attn_mask=None, key_padding_mask=None):
    B, L, E = x.shape
    H, D = mod.num_heads, mod.head_dim
    lin = lambda v, W, b: v @ W.T + b
    xq = lin(x, mod.Wq, mod.bq).reshape(B, L, H, D).transpose(0, 2, 1, 3)
    xk = lin(x, mod.Wk, mod.bk).reshape(B, L, H, D).transpose(0, 2, 1, 3)
    xv = lin(x, mod.Wv, mod.bv).reshape(B, L, H, D).transpose(0, 2, 1, 3)

    inv_freq = 1.0 / (10000.0 ** (jnp.arange(0, D, 2, dtype=jnp.float32) / D))
    freqs = jnp.arange(L, dtype=jnp.float32)[:, None] * inv_freq[None, :]
    cos = jnp.repeat(jnp.cos(freqs), 2, axis=-1)
    sin = jnp.repeat(jnp.sin(freqs), 2, axis=-1)

    def rope(v):  # interleaved-pair rotation
        v1, v2 = v[..., ::2], v[..., 1::2]
        rot = jnp.stack([-v2, v1], axis=-1).reshape(v.shape)
        return v * cos + rot * sin

    xq, xk = rope(xq), rope(xk)
    s = jnp.einsum("bnic,bnjc->bnij", xq, xk) / math.sqrt(D)
    if attn_mask is not None:
        s = jnp.where(attn_mask.reshape(1, 1, L, L), -jnp.inf, s)
    if key_padding_mask is not None:
        s = jnp.where(key_padding_mask.reshape(B, 1, 1, L), -jnp.inf, s)
    p = jax.nn.softmax(s, axis=-1)
    o = jnp.einsum("bnij,bnjc->bnic", p, xv)
    o = o.transpose(0, 2, 1, 3).reshape(B, L, E)
    return o @ mod.Wp.T + mod.bp


# --------------------------------------- main ------------------------------------------

if __name__ == "__main__":
    B, L, E, H = 2, 8, 32, 4

    key = jax.random.PRNGKey(0)
    k_param, k_x = jax.random.split(key)

    mod = RoPEAttentionPallas(embed_dim=E, num_heads=H, dropout=0.1, key=k_param)
    x = jax.random.normal(k_x, (B, L, E), dtype=jnp.float32)

    def relerr(a, b):
        a = a.astype(jnp.float32); b = b.astype(jnp.float32)
        return float(jnp.linalg.norm(a - b) / (jnp.linalg.norm(b) + 1e-12))

    # Tolerance budget: bf16 MXU operands (f32 accumulation) vs the f32 reference.
    TOL = 3e-2

    # 1) Unmasked path (bias-free specialized kernel).
    y = jax.block_until_ready(mod(x))
    y_ref = _reference(mod, x)
    assert y.shape == (B, L, E)
    assert relerr(y, y_ref) < TOL, f"no-mask rel err {relerr(y, y_ref):.4f}"

    # 2) key_padding_mask path (partially masked rows only).
    kpm = jnp.zeros((B, L), dtype=bool).at[1, L - 2:].set(True)
    y_m = jax.block_until_ready(mod(x, key_padding_mask=kpm))
    y_m_ref = _reference(mod, x, key_padding_mask=kpm)
    assert relerr(y_m, y_m_ref) < TOL, f"kpm rel err {relerr(y_m, y_m_ref):.4f}"

    # 3) attn_mask + key_padding_mask at a non-multiple-of-8 length
    #    (exercises the sequence-padding path and both mask specializations).
    L2 = 7
    x2 = jax.random.normal(jax.random.PRNGKey(1), (B, L2, E), dtype=jnp.float32)
    causal = jnp.triu(jnp.ones((L2, L2), dtype=bool), k=1)   # True = masked
    kpm2 = jnp.zeros((B, L2), dtype=bool).at[0, L2 - 1:].set(True)
    y2 = jax.block_until_ready(mod(x2, attn_mask=causal, key_padding_mask=kpm2))
    y2_ref = _reference(mod, x2, attn_mask=causal, key_padding_mask=kpm2)
    assert y2.shape == (B, L2, E)
    assert relerr(y2, y2_ref) < TOL, f"masked/padded rel err {relerr(y2, y2_ref):.4f}"

    print("KERNEL_OK")
</pallas_src>

<mosaic_0001>
module attributes {stable_mosaic.version = 11 : i64} {
  func.func @_linear_kernel(%arg0: i32, %arg1: i32, %arg2: i32, %arg3: memref<16x32xf32, #tpu.memory_space<vmem>>, %arg4: memref<32x96xf32, #tpu.memory_space<vmem>>, %arg5: memref<1x96xf32, #tpu.memory_space<vmem>>, %arg6: memref<16x96xf32, #tpu.memory_space<vmem>>, %arg7: memref<16x96xf32, #tpu.memory_space<vmem>>) attributes {dimension_semantics = [#tpu.dimension_semantics<parallel>, #tpu.dimension_semantics<parallel>, #tpu.dimension_semantics<arbitrary>], iteration_bounds = array<i64: 1, 1, 1>, scalar_prefetch = 0 : i64, scratch_operands = 1 : i64, tpu.core_type = #tpu.core_type<tc>, window_params = [{transform_indices = @transform_0, window_bounds = array<i64: 16, 32>}, {transform_indices = @transform_1, window_bounds = array<i64: 32, 96>}, {transform_indices = @transform_2, window_bounds = array<i64: 1, 96>}, {transform_indices = @transform_3, window_bounds = array<i64: 16, 96>}]} {
    %c0_i32 = arith.constant 0 : i32
    %0 = arith.cmpi eq, %arg2, %c0_i32 : i32
    %1 = arith.extui %0 : i1 to i32
    %c0_i32_0 = arith.constant 0 : i32
    %2 = arith.cmpi ne, %1, %c0_i32_0 : i32
    scf.if %2 {
      %cst_10 = arith.constant 0.000000e+00 : f32
      %14 = vector.broadcast %cst_10 : f32 to vector<16x96xf32>
      %c0_11 = arith.constant 0 : index
      %c0_12 = arith.constant 0 : index
      %15 = vector.load %arg7[%c0_11, %c0_12] : memref<16x96xf32, #tpu.memory_space<vmem>>, vector<16x96xf32>
      tpu.vector_store %arg7[%c0_11, %c0_12], %14 {strides = array<i32>} : memref<16x96xf32, #tpu.memory_space<vmem>>, vector<16x96xf32>,
    } else {
    }
    %c0 = arith.constant 0 : index
    %c0_1 = arith.constant 0 : index
    %3 = vector.load %arg7[%c0, %c0_1] : memref<16x96xf32, #tpu.memory_space<vmem>>, vector<16x96xf32>
    %c0_2 = arith.constant 0 : index
    %c0_3 = arith.constant 0 : index
    %4 = vector.load %arg3[%c0_2, %c0_3] : memref<16x32xf32, #tpu.memory_space<vmem>>, vector<16x32xf32>
    %5 = arith.truncf %4 : vector<16x32xf32> to vector<16x32xbf16>
    %c0_4 = arith.constant 0 : index
    %c0_5 = arith.constant 0 : index
    %6 = vector.load %arg4[%c0_4, %c0_5] : memref<32x96xf32, #tpu.memory_space<vmem>>, vector<32x96xf32>
    %7 = arith.truncf %6 : vector<32x96xf32> to vector<32x96xbf16>
    %cst = arith.constant dense<0.000000e+00> : vector<16x96xf32>
    %8 = tpu.matmul %5, %7, %cst {dimension_numbers = #tpu.dot_dimension_numbers<[1], [0], [0], [1], [0, 0, 1, 1], [], []>} : vector<16x32xbf16>, vector<32x96xbf16>, vector<16x96xf32> -> vector<16x96xf32>
    %9 = arith.addf %3, %8 : vector<16x96xf32>
    %c0_6 = arith.constant 0 : index
    %c0_7 = arith.constant 0 : index
    %10 = vector.load %arg7[%c0_6, %c0_7] : memref<16x96xf32, #tpu.memory_space<vmem>>, vector<16x96xf32>
    tpu.vector_store %arg7[%c0_6, %c0_7], %9 {strides = array<i32>} : memref<16x96xf32, #tpu.memory_space<vmem>>, vector<16x96xf32>,
    %c0_i32_8 = arith.constant 0 : i32
    %11 = arith.cmpi eq, %arg2, %c0_i32_8 : i32
    %12 = arith.extui %11 : i1 to i32
    %c0_i32_9 = arith.constant 0 : i32
    %13 = arith.cmpi ne, %12, %c0_i32_9 : i32
    scf.if %13 {
      %c0_10 = arith.constant 0 : index
      %c0_11 = arith.constant 0 : index
      %14 = vector.load %arg7[%c0_10, %c0_11] : memref<16x96xf32, #tpu.memory_space<vmem>>, vector<16x96xf32>
      %c0_12 = arith.constant 0 : index
      %c0_13 = arith.constant 0 : index
      %15 = vector.load %arg5[%c0_12, %c0_13] : memref<1x96xf32, #tpu.memory_space<vmem>>, vector<1x96xf32>
      %16 = vector.broadcast %15 : vector<1x96xf32> to vector<16x96xf32>
      %17 = arith.addf %14, %16 : vector<16x96xf32>
      %c0_14 = arith.constant 0 : index
      %c0_15 = arith.constant 0 : index
      %18 = vector.load %arg6[%c0_14, %c0_15] : memref<16x96xf32, #tpu.memory_space<vmem>>, vector<16x96xf32>
      tpu.vector_store %arg6[%c0_14, %c0_15], %17 {strides = array<i32>} : memref<16x96xf32, #tpu.memory_space<vmem>>, vector<16x96xf32>,
    } else {
    }
    return
  }
  func.func @transform_0(%arg0: i32, %arg1: i32, %arg2: i32) -> (i32, i32) {
    %c0_i32 = arith.constant 0 : i32
    return %arg0, %arg2 : i32, i32
  }
  func.func @transform_1(%arg0: i32, %arg1: i32, %arg2: i32) -> (i32, i32) {
    %c0_i32 = arith.constant 0 : i32
    return %arg2, %arg1 : i32, i32
  }
  func.func @transform_2(%arg0: i32, %arg1: i32, %arg2: i32) -> (i32, i32) {
    %c0_i32 = arith.constant 0 : i32
    %c0_i32_0 = arith.constant 0 : i32
    return %c0_i32, %arg1 : i32, i32
  }
  func.func @transform_3(%arg0: i32, %arg1: i32, %arg2: i32) -> (i32, i32) {
    %c0_i32 = arith.constant 0 : i32
    return %arg0, %arg1 : i32, i32
  }
}

</mosaic_0001>

<llo_original>
// kernel: tpu_custom_call.1
$region0: #{tpu_custom_call.1}
  #allocation0 [shape = 'u32[]', space=smem, size = 0x4, offset = 0x4, fixed_abs, tag = 'smem constant byte address 0x4 - core index']
  #allocation1 [shape = 'u32[72,128]{1,0:T(1,128)}', space=vmem, size = 0x9000, scoped, tag = 'internal scratch']
  #allocation2 [shape = 'f32[16,96]{1,0:T(8,128)}', space=vmem, size = 0x2000, scoped, tag = 'scratch operand']
  %s0 = inlined_call_operand.hbm [shape: f32[16,32], index: 0, kind: input, shape index: {}]
  %s1 = inlined_call_operand.hbm [shape: f32[32,96], index: 1, kind: input, shape index: {}]
  %s2 = inlined_call_operand.vmem [shape: f32[1,96], index: 2, kind: input, shape index: {}]
  %s3 = inlined_call_operand.hbm [shape: f32[16,96], index: 3, kind: output, shape index: {}]
  %s4 = sld [smem:[#allocation0]]
  $region38: #{tpu_custom_call.1} parent=0
    _
  %s6 = ssub.s32 1, %s4
  %s7 = scalar_select 0, %s6, %s4
  $region1: #{tpu_custom_call.1} parent=0
    #allocation3 [shape = 'u8[8192]{0}', space=vmem, size = 0x2000, scoped, tag = 'input window, operand 0, single buffered']
    #allocation4 [shape = 's32[1]{0}', space=sflag, size = 0x4, scoped, tag = 'scoped memory for tpu_custom_call.1']
    #allocation5 [shape = 's32[1]{0}', space=sflag, size = 0x4, scoped, tag = 'scoped memory for tpu_custom_call.1']
    #allocation6 [shape = 'u8[16384]{0}', space=vmem, size = 0x4000, scoped, tag = 'input window, operand 1, single buffered']
    #allocation7 [shape = 's32[1]{0}', space=sflag, size = 0x4, scoped, tag = 'scoped memory for tpu_custom_call.1']
    #allocation8 [shape = 'u8[8192]{0}', space=vmem, size = 0x2000, scoped, tag = 'output window, operand 0, single buffered']
    %8 = vsyncpa [#allocation4], 0
    %9 = vsyncpa [#allocation7], 0
    %10 = vsyncpa [#allocation5], 0
    // Predicated region
    $region2: #{tpu_custom_call.1} parent=1 // pred_check
      _
    $region3: #{tpu_custom_call.1} parent=1 // pred_check_branch
      %12 = sbr.rel (0) target = $region5
    $region4: #{tpu_custom_call.1} parent=1 // pred_region
      %14 = vsyncadd [#allocation4], 0
      %s15 = sshll.u32 %s0, 4
      %s16 = int_to_ptr.hbm [resolvable:$true] %s15
      %s17 = sshll.u32 [#allocation3], 4
      %s18 = int_to_ptr.vmem [resolvable:$true] %s17
      %23 = dma.hbm_to_vmem [thread:$0]  %s16, 256, %s18, [#allocation4], 128, 128, 8
    $region5: #{tpu_custom_call.1} parent=1 // pred_fallthru
      _
    // Predicated region
    $region6: #{tpu_custom_call.1} parent=1 // pred_check
      _
    $region7: #{tpu_custom_call.1} parent=1 // pred_check_branch
      %25 = sbr.rel (0) target = $region9
    $region8: #{tpu_custom_call.1} parent=1 // pred_region
      %27 = vsyncadd [#allocation7], 0
      %s28 = sshll.u32 %s1, 4
      %s29 = int_to_ptr.hbm [resolvable:$true] %s28
      %s30 = sshll.u32 [#allocation6], 4
      %s31 = int_to_ptr.vmem [resolvable:$true] %s30
      %36 = dma.hbm_to_vmem [thread:$0]  %s29, 512, %s31, [#allocation7], 128, 128, 8
    $region9: #{tpu_custom_call.1} parent=1 // pred_fallthru
      _
    // Predicated region
    $region10: #{tpu_custom_call.1} parent=1 // pred_check
      _
    $region11: #{tpu_custom_call.1} parent=1 // pred_check_branch
      %38 = sbr.rel (0) target = $region13
    $region12: #{tpu_custom_call.1} parent=1 // pred_region
      _
    $region13: #{tpu_custom_call.1} parent=1 // pred_fallthru
      _
    // Predicated region
    $region14: #{tpu_custom_call.1} parent=1 // pred_check
      _
    $region15: #{tpu_custom_call.1} parent=1 // pred_check_branch
      %40 = sbr.rel (0) target = $region17
    $region16: #{tpu_custom_call.1} parent=1 // pred_region
      %42 = dma.done [#allocation4], 256
    $region17: #{tpu_custom_call.1} parent=1 // pred_fallthru
      _
    // Predicated region
    $region18: #{tpu_custom_call.1} parent=1 // pred_check
      _
    $region19: #{tpu_custom_call.1} parent=1 // pred_check_branch
      %44 = sbr.rel (0) target = $region21
    $region20: #{tpu_custom_call.1} parent=1 // pred_region
      %46 = dma.done [#allocation7], 512
    $region21: #{tpu_custom_call.1} parent=1 // pred_fallthru
      _
    %p48 = scmp.eq.s32.totalorder 0, 0
    // Predicated region
    $region22: #{tpu_custom_call.1} parent=1 // pred_check
      %p49 = pneg %p48
    $region23: #{tpu_custom_call.1} parent=1 // pred_check_branch
      %51 = sbr.rel (%p49) target = $region25
    $region24: #{tpu_custom_call.1} parent=1 // pred_region
      %vm52 = vcmask 785408
      %53 = vst.msk [vmem:[#allocation2] sm:$0xff] %vm52, 0.0
      %54 = vst.msk [vmem:[#allocation2 + $0x8] sm:$0xff] %vm52, 0.0
    $region25: #{tpu_custom_call.1} parent=1 // pred_fallthru
      _
    %v55 = vld [vmem:[#allocation2] sm:$0xff]
    %v56 = vld [vmem:[#allocation2 + $0x8] sm:$0xff]
    %v57 = vld [vmem:[#allocation3] sm:$0xff]
    %v58 = vld [vmem:[#allocation3 + $0x8] sm:$0xff]
    %v59 = vpack.c.bf16 %v58, %v57
    %v60 = vld [vmem:[#allocation6] sm:$0xff]
    %v61 = vld [vmem:[#allocation6 + $0x8] sm:$0xff]
    %v62 = vld [vmem:[#allocation6 + $0x10] sm:$0xff]
    %v63 = vld [vmem:[#allocation6 + $0x18] sm:$0xff]
    %v64 = vpack.c.bf16 %v61, %v60
    %v65 = vpack.c.bf16 %v63, %v62
    %vm66 = vcmask 261120
    %v68 = vsel %vm66, %v59, 0
    %70 = vmatpush.bf16.msra.mxu0 0
    %71 = vmatpush.bf16.msra.mxu0 0
    %72 = vmatpush.bf16.msra.mxu0 0
    %73 = vmatpush.bf16.msra.mxu0 0
    %74 = vmatpush.bf16.msra.mxu0 0
    %75 = vmatpush.bf16.msra.mxu0 0
    %76 = vmatpush.bf16.msra.mxu0 %v65
    %77 = vmatpush.bf16.msra.mxu0 %v64
    %78 = vmatmul.bf16.gmra.mxu0 %v68
    %v79 = vpop.f32.mrf.mxu0
    %v80 = vadd.f32 0.0, %v79
    %v81 = vpop.f32.mrf.mxu0
    %v82 = vadd.f32 0.0, %v81
    %83 = vdwg.mxu0
    %v84 = vadd.f32 %v55, %v80
    %v85 = vadd.f32 %v56, %v82
    %vm86 = vcmask 785408
    %87 = vst.msk [vmem:[#allocation2] sm:$0xff] %vm86, %v84
    %88 = vst.msk [vmem:[#allocation2 + $0x8] sm:$0xff] %vm86, %v85
    // Predicated region
    $region26: #{tpu_custom_call.1} parent=1 // pred_check
      %p89 = pneg %p48
    $region27: #{tpu_custom_call.1} parent=1 // pred_check_branch
      %91 = sbr.rel (%p89) target = $region29
    $region28: #{tpu_custom_call.1} parent=1 // pred_region
      %v92 = vld [vmem:[#allocation2] sm:$0xff]
      %v93 = vld [vmem:[#allocation2 + $0x8] sm:$0xff]
      %v94 = vld [vmem:[%s2] sm:$0x1]
      %v96 = vperm.slane %v94, 0
      %v98 = vadd.f32 %v92, %v96
      %v99 = vadd.f32 %v93, %v96
      %100 = vst.msk [vmem:[#allocation8] sm:$0xff] %vm86, %v98
      %101 = vst.msk [vmem:[#allocation8 + $0x8] sm:$0xff] %vm86, %v99
    $region29: #{tpu_custom_call.1} parent=1 // pred_fallthru
      _
    // Predicated region
    $region30: #{tpu_custom_call.1} parent=1 // pred_check
      _
    $region31: #{tpu_custom_call.1} parent=1 // pred_check_branch
      %103 = sbr.rel (0) target = $region33
    $region32: #{tpu_custom_call.1} parent=1 // pred_region
      %105 = vsyncadd [#allocation5], 0
      %s106 = sshll.u32 [#allocation8], 4
      %s107 = int_to_ptr.vmem [resolvable:$true] %s106
      %s108 = sshll.u32 %s3, 4
      %s109 = int_to_ptr.hbm [resolvable:$true] %s108
      %114 = dma.vmem_to_hbm [thread:$0]  %s107, 256, %s109, [#allocation5], 128, 128, 8
    $region33: #{tpu_custom_call.1} parent=1 // pred_fallthru
      _
    // Predicated region
    $region34: #{tpu_custom_call.1} parent=1 // pred_check
      _
    $region35: #{tpu_custom_call.1} parent=1 // pred_check_branch
      %116 = sbr.rel (0) target = $region37
    $region36: #{tpu_custom_call.1} parent=1 // pred_region
      %118 = dma.done [#allocation5], 256
    $region37: #{tpu_custom_call.1} parent=1 // pred_fallthru
      _
    %119 = vsyncpa [#allocation4], 1
    %120 = vsyncpa [#allocation7], 1
    %121 = vsyncpa [#allocation5], 1

</llo_original>
